<compile_context>
chip_gen: v7x
topology: tpu7x:2x2x1
jax: 0.10.0
libtpu: 0.0.40
codegen_flags: <defaults>
</compile_context>

<pallas_src>
import math
from functools import partial

import jax
import jax.numpy as jnp
from jax.experimental import pallas as pl
from jax.experimental.pallas import tpu as pltpu


def _round_up(x, m):
    return (x + m - 1) // m * m


def _refined_reciprocal(d):
    """EUP approx reciprocal + one Newton-Raphson step (~f32 accuracy)."""
    r = pl.reciprocal(d, approx=True)
    return r * (2.0 - d * r)


def _readhead_kernel(x_ref, w_ref, b_ref, out_ref, *, M):
    """Fused linear layer + per-lane activations, single lane-dense store.

    x_ref  : (rows, C_in)   f32  controller-output rows (batch tile)
    w_ref  : (C_in, P_pad)  f32  weight, zero-padded past P = M + 6
    b_ref  : (1,    P_pad)  f32  bias, zero-padded
    out_ref: (rows, P_pad)  f32  fused activated parameters
    """
    x = x_ref[...]
    w = w_ref[...]
    b = b_ref[...]

    # MXU matmul with f32 accumulation, broadcast bias add on the VPU.
    params = jnp.dot(x, w, preferred_element_type=jnp.float32) + b

    lane = jax.lax.broadcasted_iota(jnp.int32, params.shape, 1)

    # Column layout of the fused tile:
    #   [0, M)       -> k     (identity)
    #   M            -> beta  (softplus)
    #   M + 1        -> g     (sigmoid)
    #   [M+2, M+5)   -> s     (softmax over exactly these 3 lanes)
    #   M + 5        -> y     (1 + softplus)
    #   [M+6, P_pad) -> zero padding (stays `params` == 0, sliced off outside)

    # Shared transcendental: one exp(-|x|) feeds both softplus and sigmoid.
    t = jnp.exp(-jnp.abs(params))                       # in (0, 1], never inf
    sp = jnp.maximum(params, 0.0) + jnp.log1p(t)        # softplus, stable
    inv_1pt = _refined_reciprocal(1.0 + t)
    sg = jnp.where(params >= 0.0, inv_1pt, t * inv_1pt)  # sigmoid, stable

    # Masked 3-lane softmax: pad lanes -> -inf before the max, exp masked to 0,
    # so padding lanes can never produce NaN/Inf through the reductions.
    s_mask = (lane >= M + 2) & (lane < M + 5)
    s_logits = jnp.where(s_mask, params, -jnp.inf)
    s_max = jnp.max(s_logits, axis=1, keepdims=True)
    s_exp = jnp.where(s_mask, jnp.exp(s_logits - s_max), 0.0)
    s_den = jnp.sum(s_exp, axis=1, keepdims=True)
    s_soft = s_exp * _refined_reciprocal(s_den)

    out = params                                     # k lanes + zero padding
    out = jnp.where(lane == M, sp, out)              # beta
    out = jnp.where(lane == M + 1, sg, out)          # g
    out = jnp.where(s_mask, s_soft, out)             # s
    out = jnp.where(lane == M + 5, 1.0 + sp, out)    # y
    out_ref[...] = out                               # one unmasked lane-dense store


def pad_readhead_params(w, b):
    """Pad the static Linear params to 128 lanes ONCE at init time.

    w: (C_in, P) transposed Linear weight;  b: (P,) bias.
    Returns (w_p, b_p) of shapes (C_in, P_pad) and (1, P_pad), P_pad = roundup(P, 128).
    """
    C_in, P = w.shape
    P_pad = _round_up(P, 128)
    w_p = jnp.zeros((C_in, P_pad), jnp.float32).at[:, :P].set(w.astype(jnp.float32))
    b_p = jnp.zeros((1, P_pad), jnp.float32).at[0, :P].set(b.astype(jnp.float32))
    return w_p, b_p


def _derive_block_rows(C_in, P_pad, block_b_cap, vmem_budget_bytes):
    """Largest 8-aligned row tile whose double-buffered footprint fits the budget."""
    per_row = 2 * (C_in + P_pad) * 4                 # x + out, double buffered, f32
    resident = (C_in * P_pad + P_pad) * 4            # W + bias stay resident
    budget_rows = max(8, (vmem_budget_bytes - resident) // per_row)
    return int(max(8, (min(block_b_cap, budget_rows) // 8) * 8))


def read_head_forward(x, w_p, b_p, M, *, block_b=512, vmem_budget_bytes=8 << 20):
    """NTM ReadHead forward.

    x  : (B, C_in) controller output
    w_p: (C_in, P_pad) pre-padded transposed Linear weight (see pad_readhead_params)
    b_p: (1, P_pad)    pre-padded bias
    Returns (k, beta, g, s, y) matching the PyTorch module.
    """
    x = x.astype(jnp.float32)
    B, C_in = x.shape
    P = M + 6
    P_pad = w_p.shape[1]
    assert w_p.shape == (C_in, P_pad) and b_p.shape == (1, P_pad)
    assert P_pad % 128 == 0 and P_pad >= P

    def _call(x_in, rows, n_steps):
        # Explicit VMEM limit sized from the actual tile footprint (+ headroom),
        # conservative enough for v7x's 64 MiB physical VMEM.
        need = 4 * (2 * rows * C_in + 2 * rows * P_pad + C_in * P_pad + P_pad)
        vmem_limit = int(min(max(2 * need + (2 << 20), 4 << 20), 32 << 20))
        return pl.pallas_call(
            partial(_readhead_kernel, M=M),
            out_shape=jax.ShapeDtypeStruct((x_in.shape[0], P_pad), jnp.float32),
            grid_spec=pltpu.PrefetchScalarGridSpec(
                num_scalar_prefetch=0,
                grid=(n_steps,),
                in_specs=[
                    pl.BlockSpec((rows, C_in), lambda i: (i, 0)),   # x tile, pipelined
                    pl.BlockSpec((C_in, P_pad), lambda i: (0, 0)),  # W resident
                    pl.BlockSpec((1, P_pad), lambda i: (0, 0)),     # bias resident
                ],
                out_specs=pl.BlockSpec((rows, P_pad), lambda i: (i, 0)),
            ),
            compiler_params=pltpu.CompilerParams(
                dimension_semantics=("parallel",),
                vmem_limit_bytes=vmem_limit,
            ),
        )(x_in, w_p, b_p)

    blk_cap = _derive_block_rows(C_in, P_pad, block_b, vmem_budget_bytes)

    if B <= blk_cap:
        # Single grid step: no batch padding at all (full-array blocks are
        # exempt from the (8,128) divisibility rule), no trailing row slice.
        out = _call(x, B, 1)
        params = out[:, :P]
    else:
        # Balanced 8-aligned blocks: at most 7 padded rows per block.
        n_blocks = -(-B // blk_cap)
        B_blk = _round_up(-(-B // n_blocks), 8)
        B_pad = n_blocks * B_blk
        x_p = jnp.zeros((B_pad, C_in), jnp.float32).at[:B, :].set(x)
        out = _call(x_p, B_blk, n_blocks)
        params = out[:B, :P]

    k = params[:, :M]
    beta = params[:, M:M + 1]
    g = params[:, M + 1:M + 2]
    s = params[:, M + 2:M + 5]
    y = params[:, M + 5:M + 6]
    return k, beta, g, s, y


def _reference(x, w, b, M):
    params = x @ w + b[None, :]
    k = params[:, :M]
    beta = params[:, M:M + 1]
    g = params[:, M + 1:M + 2]
    s = params[:, M + 2:M + 5]
    y = params[:, M + 5:M + 6]
    return (k,
            jax.nn.softplus(beta),
            jax.nn.sigmoid(g),
            jax.nn.softmax(s, axis=1),
            1.0 + jax.nn.softplus(y))


if __name__ == "__main__":
    # Small shapes consistent with the module: memory width M=16,
    # controller output size 32, batch 2.
    M = 16
    controller_out_size = 32
    B = 2
    P = sum([M, 1, 1, 3, 1])  # = M + 6

    key = jax.random.PRNGKey(0)
    kx, kw, kb, kx2 = jax.random.split(key, 4)

    # Deterministic param init mirroring reset():
    #   xavier_uniform_(weight, gain=1.4) -> U(-a, a), a = 1.4*sqrt(6/(fan_in+fan_out))
    #   normal_(bias, std=0.01)
    a = 1.4 * math.sqrt(6.0 / (controller_out_size + P))
    # PyTorch weight is (P, C_in); we store its transpose (C_in, P) for x @ W.
    w = jax.random.uniform(kw, (controller_out_size, P), jnp.float32, -a, a)
    b = 0.01 * jax.random.normal(kb, (P,), jnp.float32)

    # Pad static params ONCE (outside the per-step forward path).
    w_p, b_p = pad_readhead_params(w, b)

    x = jax.random.normal(kx, (B, controller_out_size), jnp.float32)

    outs = jax.block_until_ready(read_head_forward(x, w_p, b_p, M))
    refs = _reference(x, w, b, M)
    for o, r in zip(outs, refs):
        assert o.shape == r.shape and o.dtype == r.dtype
        assert jnp.allclose(o, r, atol=1e-5, rtol=1e-5)

    # Also exercise the balanced multi-block path (force a tiny block cap).
    B2 = 20
    x2 = jax.random.normal(kx2, (B2, controller_out_size), jnp.float32)
    outs2 = jax.block_until_ready(read_head_forward(x2, w_p, b_p, M, block_b=8))
    refs2 = _reference(x2, w, b, M)
    for o, r in zip(outs2, refs2):
        assert o.shape == r.shape and o.dtype == r.dtype
        assert jnp.allclose(o, r, atol=1e-5, rtol=1e-5)

    print("KERNEL_OK")
</pallas_src>

<mosaic_0001>
module attributes {stable_mosaic.version = 11 : i64} {
  func.func @_readhead_kernel(%arg0: i32, %arg1: memref<2x32xf32, #tpu.memory_space<vmem>>, %arg2: memref<32x128xf32, #tpu.memory_space<vmem>>, %arg3: memref<1x128xf32, #tpu.memory_space<vmem>>, %arg4: memref<2x128xf32, #tpu.memory_space<vmem>>) attributes {dimension_semantics = [#tpu.dimension_semantics<parallel>], iteration_bounds = array<i64: 1>, scalar_prefetch = 0 : i64, scratch_operands = 0 : i64, tpu.core_type = #tpu.core_type<tc>, window_params = [{transform_indices = @transform_0, window_bounds = array<i64: 2, 32>}, {pipeline_mode = #tpu.pipeline_mode<synchronous>, transform_indices = @transform_1, window_bounds = array<i64: 32, 128>}, {pipeline_mode = #tpu.pipeline_mode<synchronous>, transform_indices = @transform_2, window_bounds = array<i64: 1, 128>}, {transform_indices = @transform_3, window_bounds = array<i64: 2, 128>}]} {
    %c0 = arith.constant 0 : index
    %c0_0 = arith.constant 0 : index
    %0 = vector.load %arg1[%c0, %c0_0] : memref<2x32xf32, #tpu.memory_space<vmem>>, vector<2x32xf32>
    %c0_1 = arith.constant 0 : index
    %c0_2 = arith.constant 0 : index
    %1 = vector.load %arg2[%c0_1, %c0_2] : memref<32x128xf32, #tpu.memory_space<vmem>>, vector<32x128xf32>
    %c0_3 = arith.constant 0 : index
    %c0_4 = arith.constant 0 : index
    %2 = vector.load %arg3[%c0_3, %c0_4] : memref<1x128xf32, #tpu.memory_space<vmem>>, vector<1x128xf32>
    %cst = arith.constant dense<0.000000e+00> : vector<2x128xf32>
    %3 = tpu.matmul %0, %1, %cst {dimension_numbers = #tpu.dot_dimension_numbers<[1], [0], [0], [1], [0, 0, 1, 1], [], []>} : vector<2x32xf32>, vector<32x128xf32>, vector<2x128xf32> -> vector<2x128xf32>
    %4 = vector.broadcast %2 : vector<1x128xf32> to vector<2x128xf32>
    %5 = arith.addf %3, %4 : vector<2x128xf32>
    %6 = tpu.iota {dimensions = array<i32: 1>} : vector<2x128xi32>
    %7 = math.absf %5 : vector<2x128xf32>
    %cst_5 = arith.constant 0.000000e+00 : f32
    %8 = vector.broadcast %cst_5 : f32 to vector<2x128xf32>
    %9 = arith.subf %8, %7 : vector<2x128xf32>
    %10 = math.exp %9 : vector<2x128xf32>
    %cst_6 = arith.constant 0.000000e+00 : f32
    %11 = vector.broadcast %cst_6 : f32 to vector<2x128xf32>
    %12 = arith.maximumf %5, %11 : vector<2x128xf32>
    %13 = math.log1p %10 : vector<2x128xf32>
    %14 = arith.addf %12, %13 : vector<2x128xf32>
    %cst_7 = arith.constant 1.000000e+00 : f32
    %15 = vector.broadcast %cst_7 : f32 to vector<2x128xf32>
    %16 = arith.addf %15, %10 : vector<2x128xf32>
    %17 = tpu.reciprocal %16 {approx = true} : vector<2x128xf32> -> vector<2x128xf32>
    %18 = arith.mulf %16, %17 : vector<2x128xf32>
    %cst_8 = arith.constant 2.000000e+00 : f32
    %19 = vector.broadcast %cst_8 : f32 to vector<2x128xf32>
    %20 = arith.subf %19, %18 : vector<2x128xf32>
    %21 = arith.mulf %17, %20 : vector<2x128xf32>
    %cst_9 = arith.constant 0.000000e+00 : f32
    %22 = vector.broadcast %cst_9 : f32 to vector<2x128xf32>
    %23 = arith.cmpf oge, %5, %22 : vector<2x128xf32>
    %24 = arith.mulf %10, %21 : vector<2x128xf32>
    %25 = arith.select %23, %21, %24 : vector<2x128xi1>, vector<2x128xf32>
    %c18_i32 = arith.constant 18 : i32
    %26 = vector.broadcast %c18_i32 : i32 to vector<2x128xi32>
    %27 = arith.cmpi sge, %6, %26 : vector<2x128xi32>
    %c21_i32 = arith.constant 21 : i32
    %28 = vector.broadcast %c21_i32 : i32 to vector<2x128xi32>
    %29 = arith.cmpi slt, %6, %28 : vector<2x128xi32>
    %30 = arith.andi %27, %29 : vector<2x128xi1>
    %cst_10 = arith.constant 0xFF800000 : f32
    %31 = vector.broadcast %cst_10 : f32 to vector<2x128xf32>
    %32 = arith.select %30, %5, %31 : vector<2x128xi1>, vector<2x128xf32>
    %cst_11 = arith.constant dense<0xFF800000> : vector<2xf32>
    %33 = vector.multi_reduction <maximumf>, %32, %cst_11 [1] : vector<2x128xf32> to vector<2xf32>
    %34 = vector.shape_cast %33 : vector<2xf32> to vector<2x1xf32>
    %35 = vector.broadcast %34 : vector<2x1xf32> to vector<2x128xf32>
    %36 = arith.subf %32, %35 : vector<2x128xf32>
    %37 = math.exp %36 : vector<2x128xf32>
    %cst_12 = arith.constant 0.000000e+00 : f32
    %38 = vector.broadcast %cst_12 : f32 to vector<2x128xf32>
    %39 = arith.select %30, %37, %38 : vector<2x128xi1>, vector<2x128xf32>
    %cst_13 = arith.constant dense<0.000000e+00> : vector<2xf32>
    %40 = vector.multi_reduction <add>, %39, %cst_13 [1] : vector<2x128xf32> to vector<2xf32>
    %41 = vector.shape_cast %40 : vector<2xf32> to vector<2x1xf32>
    %42 = tpu.reciprocal %41 {approx = true} : vector<2x1xf32> -> vector<2x1xf32>
    %43 = arith.mulf %41, %42 : vector<2x1xf32>
    %cst_14 = arith.constant 2.000000e+00 : f32
    %44 = vector.broadcast %cst_14 : f32 to vector<2x1xf32>
    %45 = arith.subf %44, %43 : vector<2x1xf32>
    %46 = arith.mulf %42, %45 : vector<2x1xf32>
    %47 = vector.broadcast %46 : vector<2x1xf32> to vector<2x128xf32>
    %48 = arith.mulf %39, %47 : vector<2x128xf32>
    %c16_i32 = arith.constant 16 : i32
    %49 = vector.broadcast %c16_i32 : i32 to vector<2x128xi32>
    %50 = arith.cmpi eq, %6, %49 : vector<2x128xi32>
    %51 = arith.select %50, %14, %5 : vector<2x128xi1>, vector<2x128xf32>
    %c17_i32 = arith.constant 17 : i32
    %52 = vector.broadcast %c17_i32 : i32 to vector<2x128xi32>
    %53 = arith.cmpi eq, %6, %52 : vector<2x128xi32>
    %54 = arith.select %53, %25, %51 : vector<2x128xi1>, vector<2x128xf32>
    %55 = arith.select %30, %48, %54 : vector<2x128xi1>, vector<2x128xf32>
    %c21_i32_15 = arith.constant 21 : i32
    %56 = vector.broadcast %c21_i32_15 : i32 to vector<2x128xi32>
    %57 = arith.cmpi eq, %6, %56 : vector<2x128xi32>
    %cst_16 = arith.constant 1.000000e+00 : f32
    %58 = vector.broadcast %cst_16 : f32 to vector<2x128xf32>
    %59 = arith.addf %58, %14 : vector<2x128xf32>
    %60 = arith.select %57, %59, %55 : vector<2x128xi1>, vector<2x128xf32>
    %c0_17 = arith.constant 0 : index
    %c0_18 = arith.constant 0 : index
    %61 = vector.load %arg4[%c0_17, %c0_18] : memref<2x128xf32, #tpu.memory_space<vmem>>, vector<2x128xf32>
    tpu.vector_store %arg4[%c0_17, %c0_18], %60 {strides = array<i32>} : memref<2x128xf32, #tpu.memory_space<vmem>>, vector<2x128xf32>,
    return
  }
  func.func @transform_0(%arg0: i32) -> (i32, i32) {
    %c0_i32 = arith.constant 0 : i32
    %c0_i32_0 = arith.constant 0 : i32
    return %arg0, %c0_i32 : i32, i32
  }
  func.func @transform_1(%arg0: i32) -> (i32, i32) {
    %c0_i32 = arith.constant 0 : i32
    %c0_i32_0 = arith.constant 0 : i32
    %c0_i32_1 = arith.constant 0 : i32
    return %c0_i32, %c0_i32_0 : i32, i32
  }
  func.func @transform_2(%arg0: i32) -> (i32, i32) {
    %c0_i32 = arith.constant 0 : i32
    %c0_i32_0 = arith.constant 0 : i32
    %c0_i32_1 = arith.constant 0 : i32
    return %c0_i32, %c0_i32_0 : i32, i32
  }
  func.func @transform_3(%arg0: i32) -> (i32, i32) {
    %c0_i32 = arith.constant 0 : i32
    %c0_i32_0 = arith.constant 0 : i32
    return %arg0, %c0_i32 : i32, i32
  }
}

</mosaic_0001>

<llo_original>
// kernel: tpu_custom_call.1
$region0: #{tpu_custom_call.1}
  #allocation0 [shape = 'u32[]', space=smem, size = 0x4, offset = 0x4, fixed_abs, tag = 'smem constant byte address 0x4 - core index']
  #allocation1 [shape = 'u32[144,128]{1,0:T(1,128)}', space=vmem, size = 0x12000, scoped, tag = 'internal scratch']
  %s0 = inlined_call_operand.hbm [shape: f32[2,32], index: 0, kind: input, shape index: {}]
  %s1 = inlined_call_operand.hbm [shape: f32[32,128], index: 1, kind: input, shape index: {}]
  %s2 = inlined_call_operand.vmem [shape: f32[1,128], index: 2, kind: input, shape index: {}]
  %s3 = inlined_call_operand.hbm [shape: f32[2,128], index: 3, kind: output, shape index: {}]
  %s4 = sld [smem:[#allocation0]]
  $region30: #{tpu_custom_call.1} parent=0
    _
  %s6 = ssub.s32 1, %s4
  %s7 = scalar_select 0, %s6, %s4
  $region1: #{tpu_custom_call.1} parent=0
    #allocation2 [shape = 'u8[1024]{0}', space=vmem, size = 0x400, scoped, tag = 'input window, operand 0, single buffered']
    #allocation3 [shape = 's32[1]{0}', space=sflag, size = 0x4, scoped, tag = 'scoped memory for tpu_custom_call.1']
    #allocation4 [shape = 's32[1]{0}', space=sflag, size = 0x4, scoped, tag = 'scoped memory for tpu_custom_call.1']
    #allocation5 [shape = 'u8[16384]{0}', space=vmem, size = 0x4000, scoped, tag = 'input window, operand 1, single buffered']
    #allocation6 [shape = 's32[1]{0}', space=sflag, size = 0x4, scoped, tag = 'scoped memory for tpu_custom_call.1']
    #allocation7 [shape = 'u8[1024]{0}', space=vmem, size = 0x400, scoped, tag = 'output window, operand 0, single buffered']
    %8 = vsyncpa [#allocation3], 0
    %9 = vsyncpa [#allocation6], 0
    %10 = vsyncpa [#allocation4], 0
    // Predicated region
    $region2: #{tpu_custom_call.1} parent=1 // pred_check
      _
    $region3: #{tpu_custom_call.1} parent=1 // pred_check_branch
      %12 = sbr.rel (0) target = $region5
    $region4: #{tpu_custom_call.1} parent=1 // pred_region
      %s14 = ssub.s32 32, 32
      %15 = vsyncadd [#allocation3], %s14
      %s17 = sshll.u32 [#allocation2], 4
      %s18 = int_to_ptr.vmem [resolvable:$true] %s17
      %20 = dma.hbm_to_vmem [thread:$0]  %s0, 32, %s18, [#allocation3]
    $region5: #{tpu_custom_call.1} parent=1 // pred_fallthru
      _
    // Predicated region
    $region6: #{tpu_custom_call.1} parent=1 // pred_check
      _
    $region7: #{tpu_custom_call.1} parent=1 // pred_check_branch
      %22 = sbr.rel (0) target = $region9
    $region8: #{tpu_custom_call.1} parent=1 // pred_region
      %s24 = ssub.s32 512, 512
      %25 = vsyncadd [#allocation6], %s24
      %s26 = sshll.u32 [#allocation5], 4
      %s27 = int_to_ptr.vmem [resolvable:$true] %s26
      %32 = dma.hbm_to_vmem [thread:$0]  %s1, 512, %s27, [#allocation6], 128, 128, 8
    $region9: #{tpu_custom_call.1} parent=1 // pred_fallthru
      _
    // Predicated region
    $region10: #{tpu_custom_call.1} parent=1 // pred_check
      _
    $region11: #{tpu_custom_call.1} parent=1 // pred_check_branch
      %34 = sbr.rel (0) target = $region13
    $region12: #{tpu_custom_call.1} parent=1 // pred_region
      _
    $region13: #{tpu_custom_call.1} parent=1 // pred_fallthru
      _
    // Predicated region
    $region14: #{tpu_custom_call.1} parent=1 // pred_check
      _
    $region15: #{tpu_custom_call.1} parent=1 // pred_check_branch
      %36 = sbr.rel (0) target = $region17
    $region16: #{tpu_custom_call.1} parent=1 // pred_region
      %37 = dma.done [#allocation3], 32
    $region17: #{tpu_custom_call.1} parent=1 // pred_fallthru
      _
    // Predicated region
    $region18: #{tpu_custom_call.1} parent=1 // pred_check
      _
    $region19: #{tpu_custom_call.1} parent=1 // pred_check_branch
      %39 = sbr.rel (0) target = $region21
    $region20: #{tpu_custom_call.1} parent=1 // pred_region
      %40 = dma.done [#allocation6], 512
    $region21: #{tpu_custom_call.1} parent=1 // pred_fallthru
      _
    %v41 = vld [vmem:[#allocation2] sm:$0x3]
    %v42 = vld [vmem:[#allocation5] sm:$0xff]
    %v43 = vld [vmem:[#allocation5 + $0x8] sm:$0xff]
    %v44 = vld [vmem:[#allocation5 + $0x10] sm:$0xff]
    %v45 = vld [vmem:[#allocation5 + $0x18] sm:$0xff]
    %v46 = vld [vmem:[%s2] sm:$0x1]
    %v48 = vlaneseq
    %v49 = vshrl.u32 %v48, 7
    %v50 = vsub.s32 0, %v49
    %v51 = vrot.slane %v46, %v50
    %vm53 = vcmask 261120
    %v55 = vsel %vm53, %v41, 0
    %57 = vmatprep.subr.mxu0 0.0
    %58 = vmatpush1.msra.mxu0 %v42
    %59 = vmatprep.subr.mxu0 0.0
    %60 = vmatpush1.msra.mxu0 %v43
    %61 = vmatprep.subr.mxu0 0.0
    %62 = vmatpush1.msra.mxu0 %v44
    %63 = vmatprep.subr.mxu0 0.0
    %64 = vmatpush1.msra.mxu0 %v45
    %65 = vmatprep.subr.mxu0 0.0
    %66 = vmatpush1.msra.mxu0 0.0
    %67 = vmatprep.subr.mxu0 0.0
    %68 = vmatpush1.msra.mxu0 0.0
    %69 = vmatprep.subr.mxu0 0.0
    %70 = vmatpush1.msra.mxu0 0.0
    %71 = vmatprep.subr.mxu0 0.0
    %72 = vmatpush1.msra.mxu0 0.0
    %73 = vmatprep.subr.mxu0 0.0
    %74 = vmatpush1.msra.mxu0 0.0
    %75 = vmatprep.subr.mxu0 0.0
    %76 = vmatpush1.msra.mxu0 0.0
    %77 = vmatprep.subr.mxu0 0.0
    %78 = vmatpush1.msra.mxu0 0.0
    %79 = vmatprep.subr.mxu0 0.0
    %80 = vmatpush1.msra.mxu0 0.0
    %81 = vmatprep.subr.mxu0 0.0
    %82 = vmatpush1.msra.mxu0 0.0
    %83 = vmatprep.subr.mxu0 0.0
    %84 = vmatpush1.msra.mxu0 0.0
    %85 = vmatprep.subr.mxu0 0.0
    %86 = vmatpush1.msra.mxu0 0.0
    %87 = vmatprep.subr.mxu0 0.0
    %88 = vmatpush1.msra.mxu0 0.0
    %89 = vmatprep.subr.mxu0 0.0
    %90 = vmatpush1.msra.mxu0 0.0
    %91 = vmatprep.subr.mxu0 0.0
    %92 = vmatpush1.msra.mxu0 0.0
    %93 = vmatprep.subr.mxu0 0.0
    %94 = vmatpush1.msra.mxu0 0.0
    %95 = vmatprep.subr.mxu0 0.0
    %96 = vmatpush1.msra.mxu0 0.0
    %97 = vmatprep.subr.mxu0 0.0
    %98 = vmatpush1.msra.mxu0 0.0
    %99 = vmatprep.subr.mxu0 0.0
    %100 = vmatpush1.msra.mxu0 0.0
    %101 = vmatprep.subr.mxu0 0.0
    %102 = vmatpush1.msra.mxu0 0.0
    %103 = vmatprep.subr.mxu0 0.0
    %104 = vmatpush1.msra.mxu0 0.0
    %105 = vmatprep.subr.mxu0 0.0
    %106 = vmatpush1.msra.mxu0 0.0
    %107 = vmatprep.subr.mxu0 0.0
    %108 = vmatpush1.msra.mxu0 0.0
    %109 = vmatprep.subr.mxu0 0.0
    %110 = vmatpush1.msra.mxu0 0.0
    %111 = vmatprep.subr.mxu0 0.0
    %112 = vmatpush1.msra.mxu0 0.0
    %113 = vmatprep.subr.mxu0 0.0
    %114 = vmatpush1.msra.mxu0 0.0
    %115 = vmatprep.subr.mxu0 0.0
    %116 = vmatpush1.msra.mxu0 0.0
    %117 = vmatprep.subr.mxu0 0.0
    %118 = vmatpush1.msra.mxu0 0.0
    %119 = vmatprep.subr.mxu0 0.0
    %120 = vmatpush1.msra.mxu0 0.0
    %121 = vmatprep.mubr.f32.mxu0 0.0
    %122 = vmatmul.mubr.f32.gmra.mrb[0].mxu0 %v55
    %v123 = vpop.f32.mrb[0].mxu0
    %v124 = vadd.f32 %v51, %v123
    %v125 = vpop.f32.mrb[0].mxu0
    %126 = vdwg.mxu0
    %v127 = vlaneseq
    %v128 = vand.u32 %v127, 127
    %v129 = vand.u32 2147483647, %v124
    %v130 = vsub.f32 0.0, %v129
    %v131 = vmul.f32 %v130, 1.442695
    %v132 = vpow.pop %v131
    %v133 = vmax.f32 %v124, 0.0
    %v134 = vadd.f32 %v132, 1.0
    %v135 = vlog2.pop %v134
    %v136 = vmul.f32 %v135, 0.6931472
    %v137 = vmul.f32 -0.5, %v132
    %v138 = vadd.f32 %v137, 1.0
    %v139 = vmul.f32 %v138, %v132
    %v140 = vand.u32 2147483647, %v132
    %vm141 = vcmp.lt.f32.partialorder %v140, 0.0004427343
    %v142 = vsel %vm141, %v139, %v136
    %v143 = vadd.f32 %v133, %v142
    %v144 = vadd.f32 %v132, 1.0
    %v145 = vrcp.pop %v144
    %v146 = vmul.f32 %v144, %v145
    %v147 = vsub.f32 2.0, %v146
    %v148 = vmul.f32 %v145, %v147
    %vm149 = vcmp.ge.f32.partialorder %v124, 0.0
    %v150 = vmul.f32 %v132, %v148
    %v151 = vsel %vm149, %v148, %v150
    %vm152 = vcmp.ge.s32.totalorder %v128, 18
    %vm153 = vcmp.lt.s32.totalorder %v128, 21
    %vm154 = vmand %vm152, %vm153
    %v155 = vsel %vm154, %v124, -inf
    %vm156 = vcmask 1041408
    %v157 = vsel %vm156, %v155, -inf
    %158 = vmax.xlane.f32.xlu0 %v157
    %v159 = vpop.xlane.xlu0 %158
    %v160 = vsub.f32 %v155, %v159
    %v161 = vmul.f32 %v160, 1.442695
    %v162 = vpow.pop %v161
    %v163 = vsel %vm154, %v162, 0.0
    %v164 = vsel %vm156, %v163, 0.0
    %165 = vadd.xlane.f32.xlu0 %v164
    %v166 = vpop.xlane.xlu0 %165
    %v167 = vrcp.pop %v166
    %v168 = vmul.f32 %v166, %v167
    %v169 = vsub.f32 2.0, %v168
    %v170 = vmul.f32 %v167, %v169
    %v171 = vmul.f32 %v163, %v170
    %vm172 = vcmp.eq.s32.totalorder %v128, 16
    %v173 = vsel %vm172, %v143, %v124
    %vm174 = vcmp.eq.s32.totalorder %v128, 17
    %v175 = vsel %vm174, %v151, %v173
    %v176 = vsel %vm154, %v171, %v175
    %vm177 = vcmp.eq.s32.totalorder %v128, 21
    %v178 = vadd.f32 %v143, 1.0
    %v179 = vsel %vm177, %v178, %v176
    %180 = vst [vmem:[#allocation7] sm:$0x3] %v179
    // Predicated region
    $region22: #{tpu_custom_call.1} parent=1 // pred_check
      _
    $region23: #{tpu_custom_call.1} parent=1 // pred_check_branch
      %182 = sbr.rel (0) target = $region25
    $region24: #{tpu_custom_call.1} parent=1 // pred_region
      %s184 = ssub.s32 32, 32
      %185 = vsyncadd [#allocation4], %s184
      %s187 = sshll.u32 [#allocation7], 4
      %s188 = int_to_ptr.vmem [resolvable:$true] %s187
      %190 = dma.vmem_to_hbm [thread:$0]  %s188, 32, %s3, [#allocation4]
    $region25: #{tpu_custom_call.1} parent=1 // pred_fallthru
      _
    // Predicated region
    $region26: #{tpu_custom_call.1} parent=1 // pred_check
      _
    $region27: #{tpu_custom_call.1} parent=1 // pred_check_branch
      %192 = sbr.rel (0) target = $region29
    $region28: #{tpu_custom_call.1} parent=1 // pred_region
      %193 = dma.done [#allocation4], 32
    $region29: #{tpu_custom_call.1} parent=1 // pred_fallthru
      _
    %194 = vsyncpa [#allocation3], 1
    %195 = vsyncpa [#allocation6], 1
    %196 = vsyncpa [#allocation4], 1

</llo_original>
